<compile_context>
chip_gen: v6e
topology: v6e:2x2x1
jax: 0.10.0
libtpu: 0.0.40
codegen_flags: <defaults>
</compile_context>

<pallas_src>
import jax
import jax.numpy as jnp
import numpy as np
from jax.experimental import pallas as pl
from jax.experimental.pallas import tpu as pltpu


def _skipgram_kernel(f_ref, c_ref, out_ref, acc_ref):
    """One block of TB pairs per grid step.

    f_ref   : VMEM f32 (TB, E_pad)  focus rows for this block
    c_ref   : VMEM f32 (TB, E_pad)  context rows for this block
    out_ref : VMEM f32 (1, 1)       logsigmoid(score)
    acc_ref : VMEM f32 (8, E_pad)   persistent vector accumulator
    """
    i = pl.program_id(0)

    @pl.when(i == 0)
    def _init():
        acc_ref[...] = jnp.zeros_like(acc_ref)

    # Pure VPU: elementwise product, then fold the TB rows down to 8 rows by
    # summing whole vregs (no cross-lane / cross-sublane traffic).
    prod = f_ref[...] * c_ref[...]                       # (TB, E_pad)
    tb, e = prod.shape
    acc_ref[...] += jnp.sum(prod.reshape(tb // 8, 8, e), axis=0)

    @pl.when(i == pl.num_programs(0) - 1)
    def _finalize():
        # Single sublane reduce + single lane reduce -> (1, 1) score.
        partial = jnp.sum(acc_ref[...], axis=0, keepdims=True)   # (1, E_pad)
        score = jnp.sum(partial, axis=1, keepdims=True)          # (1, 1)
        # Numerically stable logsigmoid: min(x, 0) - log1p(exp(-|x|))
        out_ref[...] = jnp.minimum(score, 0.0) - jnp.log1p(jnp.exp(-jnp.abs(score)))


def skipgram_forward(table, focus, context, *, max_block=512):
    """Pallas-backed SkipGram forward.

    table   : (V, E) float32 embedding matrix
    focus   : (N,)   int   word indices
    context : (N,)   int   word indices
    returns : (1, 1) float32 logsigmoid(score)
    """
    V, E = table.shape
    focus = jnp.asarray(focus).reshape(-1)
    context = jnp.asarray(context).reshape(-1)
    N = int(focus.shape[0])

    if N == 0:
        # Empty batch: score is 0, logsigmoid(0) = log(1/2).
        return jnp.full((1, 1), jnp.log(0.5), dtype=jnp.float32)

    # Clamp indices (the gather below has no useful OOB behavior for callers).
    focus = jnp.clip(focus.astype(jnp.int32), 0, V - 1)
    context = jnp.clip(context.astype(jnp.int32), 0, V - 1)

    # Gather only the 2N needed rows outside the kernel; never touch / pad the
    # whole (V, E) table.
    f_rows = jnp.take(table, focus, axis=0).astype(jnp.float32)   # (N, E)
    c_rows = jnp.take(table, context, axis=0).astype(jnp.float32)  # (N, E)

    # Lane-dense E, sublane-dense block size (zeros are dot-product neutral).
    E_pad = ((E + 127) // 128) * 128
    TB = min(max_block, ((N + 7) // 8) * 8)          # multiple of 8
    N_pad = ((N + TB - 1) // TB) * TB

    pad_n, pad_e = N_pad - N, E_pad - E
    if pad_n or pad_e:
        f_rows = jnp.pad(f_rows, ((0, pad_n), (0, pad_e)))
        c_rows = jnp.pad(c_rows, ((0, pad_n), (0, pad_e)))

    num_blocks = N_pad // TB

    cost = pl.CostEstimate(
        flops=2 * N_pad * E_pad + 2 * (8 * E_pad),   # block FMAs + final reduce
        transcendentals=2,                           # exp + log1p
        bytes_accessed=2 * N_pad * E_pad * 4 + 4,
    )

    return pl.pallas_call(
        _skipgram_kernel,
        out_shape=jax.ShapeDtypeStruct((1, 1), jnp.float32),
        grid_spec=pltpu.PrefetchScalarGridSpec(
            num_scalar_prefetch=0,
            grid=(num_blocks,),
            in_specs=[
                pl.BlockSpec((TB, E_pad), lambda i: (i, 0)),
                pl.BlockSpec((TB, E_pad), lambda i: (i, 0)),
            ],
            out_specs=pl.BlockSpec((1, 1), lambda i: (0, 0)),
            scratch_shapes=[pltpu.VMEM((8, E_pad), jnp.float32)],
        ),
        compiler_params=pltpu.CompilerParams(
            # Output/accumulator is resident across the grid axis -> arbitrary.
            dimension_semantics=("arbitrary",),
        ),
        cost_estimate=cost,
    )(f_rows, c_rows)


def _reference(table, focus, context):
    ef = table[focus].reshape(1, -1)
    ec = table[context].reshape(1, -1)
    score = ef @ ec.T
    return jax.nn.log_sigmoid(score)


if __name__ == "__main__":
    vocab_size = 16
    embd_size = 32

    key = jax.random.PRNGKey(0)
    # Deterministic "nn.Embedding" weight init (synthetic, no checkpoint load).
    table = jax.random.normal(key, (vocab_size, embd_size), dtype=jnp.float32)

    # Canonical skip-gram call: one focus word, one context word.
    focus = jnp.array([3], dtype=jnp.int32)
    context = jnp.array([7], dtype=jnp.int32)

    out = skipgram_forward(table, focus, context)
    out = jax.block_until_ready(out)

    ref = _reference(table, focus, context)
    np.testing.assert_allclose(np.asarray(out), np.asarray(ref), rtol=1e-5, atol=1e-5)
    assert out.shape == (1, 1) and out.dtype == jnp.float32

    # Multi-pair accumulation path (flattened-view semantics), exercises
    # padding to a full 8-row sublane block.
    focus_multi = jnp.array([3, 0, 11, 7], dtype=jnp.int32)
    context_multi = jnp.array([7, 5, 2, 14], dtype=jnp.int32)
    out_multi = jax.block_until_ready(skipgram_forward(table, focus_multi, context_multi))
    ref_multi = _reference(table, focus_multi, context_multi)
    np.testing.assert_allclose(
        np.asarray(out_multi), np.asarray(ref_multi), rtol=1e-5, atol=1e-5
    )

    # Larger N to exercise the multi-block (grid > 1) accumulation path.
    key_f, key_c = jax.random.split(jax.random.PRNGKey(1))
    focus_big = jax.random.randint(key_f, (50,), 0, vocab_size, dtype=jnp.int32)
    context_big = jax.random.randint(key_c, (50,), 0, vocab_size, dtype=jnp.int32)
    out_big = jax.block_until_ready(skipgram_forward(table, focus_big, context_big, max_block=16))
    ref_big = _reference(table, focus_big, context_big)
    np.testing.assert_allclose(np.asarray(out_big), np.asarray(ref_big), rtol=1e-5, atol=1e-5)

    print("KERNEL_OK")
</pallas_src>

<mosaic_0001>
module attributes {stable_mosaic.version = 11 : i64} {
  func.func @_skipgram_kernel(%arg0: i32, %arg1: memref<8x128xf32, #tpu.memory_space<vmem>>, %arg2: memref<8x128xf32, #tpu.memory_space<vmem>>, %arg3: memref<1x1xf32, #tpu.memory_space<vmem>>, %arg4: memref<8x128xf32, #tpu.memory_space<vmem>>) attributes {dimension_semantics = [#tpu.dimension_semantics<arbitrary>], iteration_bounds = array<i64: 1>, scalar_prefetch = 0 : i64, scratch_operands = 1 : i64, tpu.core_type = #tpu.core_type<tc>, window_params = [{transform_indices = @transform_0, window_bounds = array<i64: 8, 128>}, {transform_indices = @transform_1, window_bounds = array<i64: 8, 128>}, {pipeline_mode = #tpu.pipeline_mode<synchronous>, transform_indices = @transform_2, window_bounds = array<i64: 1, 1>}]} {
    %c0_i32 = arith.constant 0 : i32
    %0 = arith.cmpi eq, %arg0, %c0_i32 : i32
    %1 = arith.extui %0 : i1 to i32
    %c0_i32_0 = arith.constant 0 : i32
    %2 = arith.cmpi ne, %1, %c0_i32_0 : i32
    scf.if %2 {
      %cst_10 = arith.constant 0.000000e+00 : f32
      %14 = vector.broadcast %cst_10 : f32 to vector<8x128xf32>
      %c0_11 = arith.constant 0 : index
      %c0_12 = arith.constant 0 : index
      %15 = vector.load %arg4[%c0_11, %c0_12] : memref<8x128xf32, #tpu.memory_space<vmem>>, vector<8x128xf32>
      tpu.vector_store %arg4[%c0_11, %c0_12], %14 {strides = array<i32>} : memref<8x128xf32, #tpu.memory_space<vmem>>, vector<8x128xf32>,
    } else {
    }
    %c0 = arith.constant 0 : index
    %c0_1 = arith.constant 0 : index
    %3 = vector.load %arg1[%c0, %c0_1] : memref<8x128xf32, #tpu.memory_space<vmem>>, vector<8x128xf32>
    %c0_2 = arith.constant 0 : index
    %c0_3 = arith.constant 0 : index
    %4 = vector.load %arg2[%c0_2, %c0_3] : memref<8x128xf32, #tpu.memory_space<vmem>>, vector<8x128xf32>
    %5 = arith.mulf %3, %4 : vector<8x128xf32>
    %c0_4 = arith.constant 0 : index
    %c0_5 = arith.constant 0 : index
    %6 = vector.load %arg4[%c0_4, %c0_5] : memref<8x128xf32, #tpu.memory_space<vmem>>, vector<8x128xf32>
    %7 = vector.shape_cast %5 : vector<8x128xf32> to vector<1x8x128xf32>
    %cst = arith.constant dense<0.000000e+00> : vector<8x128xf32>
    %8 = vector.multi_reduction <add>, %7, %cst [0] : vector<1x8x128xf32> to vector<8x128xf32>
    %9 = arith.addf %6, %8 : vector<8x128xf32>
    %c0_6 = arith.constant 0 : index
    %c0_7 = arith.constant 0 : index
    %10 = vector.load %arg4[%c0_6, %c0_7] : memref<8x128xf32, #tpu.memory_space<vmem>>, vector<8x128xf32>
    tpu.vector_store %arg4[%c0_6, %c0_7], %9 {strides = array<i32>} : memref<8x128xf32, #tpu.memory_space<vmem>>, vector<8x128xf32>,
    %c0_i32_8 = arith.constant 0 : i32
    %11 = arith.cmpi eq, %arg0, %c0_i32_8 : i32
    %12 = arith.extui %11 : i1 to i32
    %c0_i32_9 = arith.constant 0 : i32
    %13 = arith.cmpi ne, %12, %c0_i32_9 : i32
    scf.if %13 {
      %c0_10 = arith.constant 0 : index
      %c0_11 = arith.constant 0 : index
      %14 = vector.load %arg4[%c0_10, %c0_11] : memref<8x128xf32, #tpu.memory_space<vmem>>, vector<8x128xf32>
      %cst_12 = arith.constant dense<0.000000e+00> : vector<128xf32>
      %15 = vector.multi_reduction <add>, %14, %cst_12 [0] : vector<8x128xf32> to vector<128xf32>
      %16 = vector.shape_cast %15 : vector<128xf32> to vector<1x128xf32>
      %cst_13 = arith.constant dense<0.000000e+00> : vector<1xf32>
      %17 = vector.multi_reduction <add>, %16, %cst_13 [1] : vector<1x128xf32> to vector<1xf32>
      %18 = vector.shape_cast %17 : vector<1xf32> to vector<1x1xf32>
      %cst_14 = arith.constant 0.000000e+00 : f32
      %19 = vector.broadcast %cst_14 : f32 to vector<1x1xf32>
      %20 = arith.minimumf %18, %19 : vector<1x1xf32>
      %21 = math.absf %18 : vector<1x1xf32>
      %cst_15 = arith.constant 0.000000e+00 : f32
      %22 = vector.broadcast %cst_15 : f32 to vector<1x1xf32>
      %23 = arith.subf %22, %21 : vector<1x1xf32>
      %24 = math.exp %23 : vector<1x1xf32>
      %25 = math.log1p %24 : vector<1x1xf32>
      %26 = arith.subf %20, %25 : vector<1x1xf32>
      %c0_16 = arith.constant 0 : index
      %c0_17 = arith.constant 0 : index
      %27 = vector.load %arg3[%c0_16, %c0_17] : memref<1x1xf32, #tpu.memory_space<vmem>>, vector<1x1xf32>
      tpu.vector_store %arg3[%c0_16, %c0_17], %26 {strides = array<i32>} : memref<1x1xf32, #tpu.memory_space<vmem>>, vector<1x1xf32>,
    } else {
    }
    return
  }
  func.func @transform_0(%arg0: i32) -> (i32, i32) {
    %c0_i32 = arith.constant 0 : i32
    %c0_i32_0 = arith.constant 0 : i32
    return %arg0, %c0_i32 : i32, i32
  }
  func.func @transform_1(%arg0: i32) -> (i32, i32) {
    %c0_i32 = arith.constant 0 : i32
    %c0_i32_0 = arith.constant 0 : i32
    return %arg0, %c0_i32 : i32, i32
  }
  func.func @transform_2(%arg0: i32) -> (i32, i32) {
    %c0_i32 = arith.constant 0 : i32
    %c0_i32_0 = arith.constant 0 : i32
    %c0_i32_1 = arith.constant 0 : i32
    return %c0_i32, %c0_i32_0 : i32, i32
  }
}

</mosaic_0001>

<llo_original>
// kernel: tpu_custom_call.1
$region0: #{tpu_custom_call.1}
  #allocation0 [shape = 'u32[]', space=smem, size = 0x4, offset = 0x4, fixed_abs, tag = 'smem constant byte address 0x4 - core index']
  #allocation1 [shape = 'u32[144,128]{1,0:T(1,128)}', space=vmem, size = 0x12000, scoped, tag = 'internal scratch']
  #allocation2 [shape = 'f32[8,128]{1,0:T(8,128)}', space=vmem, size = 0x1000, scoped, tag = 'scratch operand']
  %s0 = inlined_call_operand.hbm [shape: f32[8,128], index: 0, kind: input, shape index: {}]
  %s1 = inlined_call_operand.hbm [shape: f32[8,128], index: 1, kind: input, shape index: {}]
  %s2 = inlined_call_operand.hbm [shape: f32[1,1], index: 2, kind: output, shape index: {}]
  %s3 = sld [smem:[#allocation0]]
  $region34: #{tpu_custom_call.1} parent=0
    _
  %s5 = ssub.s32 1, %s3
  %s6 = scalar_select 0, %s5, %s3
  $region1: #{tpu_custom_call.1} parent=0
    #allocation3 [shape = 'u8[4096]{0}', space=vmem, size = 0x1000, scoped, tag = 'input window, operand 0, single buffered']
    #allocation4 [shape = 's32[1]{0}', space=sflag, size = 0x4, scoped, tag = 'scoped memory for tpu_custom_call.1']
    #allocation5 [shape = 's32[1]{0}', space=sflag, size = 0x4, scoped, tag = 'scoped memory for tpu_custom_call.1']
    #allocation6 [shape = 'u8[4096]{0}', space=vmem, size = 0x1000, scoped, tag = 'input window, operand 1, single buffered']
    #allocation7 [shape = 's32[1]{0}', space=sflag, size = 0x4, scoped, tag = 'scoped memory for tpu_custom_call.1']
    #allocation8 [shape = 'u8[512]{0}', space=vmem, size = 0x400, scoped, tag = 'output window, operand 0, single buffered']
    %7 = vsyncpa [#allocation4], 0
    %8 = vsyncpa [#allocation7], 0
    %9 = vsyncpa [#allocation5], 0
    // Predicated region
    $region2: #{tpu_custom_call.1} parent=1 // pred_check
      _
    $region3: #{tpu_custom_call.1} parent=1 // pred_check_branch
      %11 = sbr.rel (0) target = $region5
    $region4: #{tpu_custom_call.1} parent=1 // pred_region
      %s13 = ssub.s32 128, 128
      %14 = vsyncadd [#allocation4], %s13
      %s16 = sshll.u32 [#allocation3], 4
      %s17 = int_to_ptr.vmem [resolvable:$true] %s16
      %19 = dma.hbm_to_vmem [thread:$0]  %s0, 128, %s17, [#allocation4]
    $region5: #{tpu_custom_call.1} parent=1 // pred_fallthru
      _
    // Predicated region
    $region6: #{tpu_custom_call.1} parent=1 // pred_check
      _
    $region7: #{tpu_custom_call.1} parent=1 // pred_check_branch
      %21 = sbr.rel (0) target = $region9
    $region8: #{tpu_custom_call.1} parent=1 // pred_region
      %s23 = ssub.s32 128, 128
      %24 = vsyncadd [#allocation7], %s23
      %s26 = sshll.u32 [#allocation6], 4
      %s27 = int_to_ptr.vmem [resolvable:$true] %s26
      %29 = dma.hbm_to_vmem [thread:$0]  %s1, 128, %s27, [#allocation7]
    $region9: #{tpu_custom_call.1} parent=1 // pred_fallthru
      _
    // Predicated region
    $region10: #{tpu_custom_call.1} parent=1 // pred_check
      _
    $region11: #{tpu_custom_call.1} parent=1 // pred_check_branch
      %31 = sbr.rel (0) target = $region13
    $region12: #{tpu_custom_call.1} parent=1 // pred_region
      %32 = dma.done [#allocation4], 128
    $region13: #{tpu_custom_call.1} parent=1 // pred_fallthru
      _
    // Predicated region
    $region14: #{tpu_custom_call.1} parent=1 // pred_check
      _
    $region15: #{tpu_custom_call.1} parent=1 // pred_check_branch
      %34 = sbr.rel (0) target = $region17
    $region16: #{tpu_custom_call.1} parent=1 // pred_region
      %35 = dma.done [#allocation7], 128
    $region17: #{tpu_custom_call.1} parent=1 // pred_fallthru
      _
    %p36 = scmp.eq.s32.totalorder 0, 0
    // Predicated region
    $region18: #{tpu_custom_call.1} parent=1 // pred_check
      %p37 = pneg %p36
    $region19: #{tpu_custom_call.1} parent=1 // pred_check_branch
      %39 = sbr.rel (%p37) target = $region21
    $region20: #{tpu_custom_call.1} parent=1 // pred_region
      %40 = vst [vmem:[#allocation2] sm:$0xff] 0.0
    $region21: #{tpu_custom_call.1} parent=1 // pred_fallthru
      _
    %v41 = vld [vmem:[#allocation3] sm:$0xff]
    %v42 = vld [vmem:[#allocation6] sm:$0xff]
    %v43 = vmul.f32 %v41, %v42
    %v44 = vld [vmem:[#allocation2] sm:$0xff]
    %v45 = vadd.f32 %v43, 0.0
    %v46 = vadd.f32 %v44, %v45
    %47 = vst [vmem:[#allocation2] sm:$0xff] %v46
    // Predicated region
    $region22: #{tpu_custom_call.1} parent=1 // pred_check
      %p48 = pneg %p36
    $region23: #{tpu_custom_call.1} parent=1 // pred_check_branch
      %50 = sbr.rel (%p48) target = $region25
    $region24: #{tpu_custom_call.1} parent=1 // pred_region
      %v51 = vld [vmem:[#allocation2] sm:$0xff]
      %v52 = vrot.slane %v51, 4
      %v53 = vadd.f32 %v51, %v52
      %v54 = vrot.slane %v53, 2
      %v55 = vadd.f32 %v53, %v54
      %v56 = vrot.slane %v55, 1
      %v57 = vadd.f32 %v55, %v56
      %58 = vadd.xlane.f32.xlu0 %v57
      %v59 = vpop.xlane.xlu0 %58
      %v60 = vmin.f32 %v59, 0.0
      %v61 = vand.u32 2147483647, %v59
      %v62 = vsub.f32 0.0, %v61
      %v63 = vmul.f32 %v62, 1.442695
      %v64 = vpow.pop %v63
      %v65 = vadd.f32 %v64, 1.0
      %v66 = vlog2.pop %v65
      %v67 = vmul.f32 %v66, 0.6931472
      %v68 = vmul.f32 -0.5, %v64
      %v69 = vadd.f32 %v68, 1.0
      %v70 = vmul.f32 %v69, %v64
      %v71 = vand.u32 2147483647, %v64
      %vm72 = vcmp.lt.f32.partialorder %v71, 0.0004427343
      %v73 = vsel %vm72, %v70, %v67
      %v74 = vsub.f32 %v60, %v73
      %vm75 = vcmask 0
      %76 = vst.msk [vmem:[#allocation8] sm:$0x1] %vm75, %v74
    $region25: #{tpu_custom_call.1} parent=1 // pred_fallthru
      _
    // Predicated region
    $region26: #{tpu_custom_call.1} parent=1 // pred_check
      _
    $region27: #{tpu_custom_call.1} parent=1 // pred_check_branch
      %78 = sbr.rel (0) target = $region29
    $region28: #{tpu_custom_call.1} parent=1 // pred_region
      %s80 = ssub.s32 16, 16
      %81 = vsyncadd [#allocation5], %s80
      %s83 = sshll.u32 [#allocation8], 4
      %s84 = int_to_ptr.vmem [resolvable:$true] %s83
      %86 = dma.vmem_to_hbm [thread:$0]  %s84, 16, %s2, [#allocation5]
    $region29: #{tpu_custom_call.1} parent=1 // pred_fallthru
      _
    // Predicated region
    $region30: #{tpu_custom_call.1} parent=1 // pred_check
      _
    $region31: #{tpu_custom_call.1} parent=1 // pred_check_branch
      %88 = sbr.rel (0) target = $region33
    $region32: #{tpu_custom_call.1} parent=1 // pred_region
      %89 = dma.done [#allocation5], 16
    $region33: #{tpu_custom_call.1} parent=1 // pred_fallthru
      _
    %90 = vsyncpa [#allocation4], 1
    %91 = vsyncpa [#allocation7], 1
    %92 = vsyncpa [#allocation5], 1

</llo_original>
